<compile_context>
chip_gen: v6e
topology: v6e:2x2x1
jax: 0.10.0
libtpu: 0.0.40
codegen_flags: <defaults>
</compile_context>

<pallas_src>
import functools

import jax
import jax.numpy as jnp
from jax import lax
from jax.experimental import pallas as pl
from jax.experimental.pallas import tpu as pltpu


def _vit_intermediate_kernel(x_ref, w_ref, p_ref, out_ref, *, eps, ratio):
    # x_ref : (tile, H)  f32   input rows
    # w_ref : (H, I)     bf16  dense weight (resident across the grid)
    # p_ref : (8, I)     f32   stacked per-channel params:
    #           row 0: effective bias (dense_b + move @ W)
    #           row 1: LN gamma
    #           row 2: LN beta - rprelu move1   (folded)
    #           row 3: prelu alpha
    #           row 4: rprelu move2
    # out_ref: (tile, I)
    x = x_ref[...]                                     # f32
    h = x.shape[1]
    inv_i = 1.0 / out_ref.shape[1]

    # ---- dense (H -> I) on the MXU: bf16 operands, f32 accumulation ----
    y = jnp.dot(x.astype(jnp.bfloat16), w_ref[...],
                preferred_element_type=jnp.float32)
    y = y + p_ref[0:1, :]                              # folded bias

    # ---- two-pass LayerNorm stats (non-negative variance by construction) --
    mean = jnp.sum(y, axis=-1, keepdims=True) * inv_i
    yc = y - mean
    var = jnp.sum(yc * yc, axis=-1, keepdims=True) * inv_i
    inv_std = lax.rsqrt(var + eps)                     # EUP slot

    gamma = p_ref[1:2, :]
    beta_m1 = p_ref[2:3, :]
    alpha = p_ref[3:4, :]
    m2 = p_ref[4:5, :]

    if h % 128 == 0:
        # Lane-aligned chunked epilogue: the concat([x]*ratio) residual is a
        # broadcast add per chunk; no (tile, I) replicated x is materialized.
        for r in range(ratio):
            lo = r * h
            hi = lo + h
            z = yc[:, lo:hi] * inv_std * gamma[:, lo:hi] + beta_m1[:, lo:hi] + x
            out_ref[:, lo:hi] = (jnp.where(z > 0, z, alpha[:, lo:hi] * z)
                                 + m2[:, lo:hi]).astype(out_ref.dtype)
    else:
        # H not a multiple of 128: chunked column stores would be masked
        # vst.msk partial stores; do one full-width lane-dense store instead.
        x_rep = jnp.concatenate([x] * ratio, axis=-1)
        z = yc * inv_std * gamma + beta_m1 + x_rep
        out_ref[...] = (jnp.where(z > 0, z, alpha * z) + m2).astype(out_ref.dtype)


def _round_up(a, b):
    return (a + b - 1) // b * b


def vit_intermediate(hidden_states, params, *, eps=1e-12, row_tile=512,
                     out_dtype=jnp.float32):
    """hidden_states: (B, S, H) -> (B, S, I)."""
    B, S, H = hidden_states.shape
    W = params["dense_w"]
    I = W.shape[1]
    ratio = I // H
    assert ratio * H == I
    rows = B * S

    x2d = hidden_states.reshape(rows, H).astype(jnp.float32)
    w_bf = W.astype(jnp.bfloat16)

    # Fold the input shift into the bias: (x+move) @ W + b == x @ W + (move@W + b)
    b_eff = params["dense_b"].astype(jnp.float32) + (
        params["move"].astype(jnp.float32) @ W.astype(jnp.float32))
    # Fold LN beta and RPReLU move1 into a single additive row.
    beta_m1 = (params["ln_beta"].astype(jnp.float32)
               - params["rprelu_move1"].astype(jnp.float32))

    zeros_i = jnp.zeros((I,), jnp.float32)
    pstack = jnp.stack([
        b_eff,
        params["ln_gamma"].astype(jnp.float32),
        beta_m1,
        params["prelu_alpha"].astype(jnp.float32),
        params["rprelu_move2"].astype(jnp.float32),
        zeros_i, zeros_i, zeros_i,
    ], axis=0)

    # ---- per-generation VMEM budget (v7x has only 64 MiB per TensorCore) ----
    try:
        vmem_cap = int(pltpu.get_tpu_info().vmem_capacity_bytes)
    except Exception:
        vmem_cap = 64 * 1024 * 1024     # conservative fallback
    vmem_budget = int(0.85 * vmem_cap)

    out_bytes = jnp.dtype(out_dtype).itemsize

    def vmem_est(t):
        return (2 * t * H * 4            # x tiles (double-buffered)
                + 2 * t * I * out_bytes  # out tiles (double-buffered)
                + 2 * H * I * 2          # weight (worst case double-buffered)
                + 2 * 8 * I * 4          # param slab
                + 3 * t * I * 4)         # y / yc / epilogue f32 temps

    # Row tile: multiple of 8, at least 2 grid steps when possible (so the
    # 'parallel' axis feeds both v7x TensorCores), shrunk until the per-step
    # working set fits this chip's VMEM budget. No row padding is done: the
    # grid uses cdiv and Pallas masks the partial last block.
    tile = min(row_tile, _round_up(pl.cdiv(rows, 2), 8))
    tile = max(8, min(tile, _round_up(rows, 8)))
    while tile > 64 and vmem_est(tile) > vmem_budget:
        tile //= 2
    tile = max(8, _round_up(tile, 8))

    vmem_limit = int(min(max(vmem_est(tile), 16 * 1024 * 1024), vmem_budget))

    cost = pl.CostEstimate(
        flops=2 * rows * H * I,
        transcendentals=rows,
        bytes_accessed=(rows * H * 4 + H * I * 2 + 8 * I * 4
                        + rows * I * out_bytes),
    )

    grid = (pl.cdiv(rows, tile),)
    kernel = functools.partial(_vit_intermediate_kernel, eps=eps, ratio=ratio)

    def run(single_buffer_consts):
        # Constant-index operands don't need double buffering; request a
        # single buffer (saves ~H*I*2 bytes of VMEM, most relevant on v7x).
        const_kw = ({"pipeline_mode": pl.Buffered(1)}
                    if single_buffer_consts else {})
        return pl.pallas_call(
            kernel,
            out_shape=jax.ShapeDtypeStruct((rows, I), out_dtype),
            grid_spec=pltpu.PrefetchScalarGridSpec(
                num_scalar_prefetch=0,
                grid=grid,
                in_specs=[
                    pl.BlockSpec((tile, H), lambda i: (i, 0)),            # x rows (f32)
                    pl.BlockSpec((H, I), lambda i: (0, 0), **const_kw),   # weight (bf16)
                    pl.BlockSpec((8, I), lambda i: (0, 0), **const_kw),   # params (f32)
                ],
                out_specs=pl.BlockSpec((tile, I), lambda i: (i, 0)),
            ),
            compiler_params=pltpu.CompilerParams(
                dimension_semantics=("parallel",),
                vmem_limit_bytes=vmem_limit,
            ),
            cost_estimate=cost,
        )(x2d, w_bf, pstack)

    try:
        out2d = jax.block_until_ready(run(True))
    except Exception:
        # pipeline_mode=Buffered(1) not supported by this JAX/runtime: fall
        # back to default double-buffering (correctness unchanged).
        out2d = run(False)

    return out2d.reshape(B, S, I)


def init_params(key, hidden_size, intermediate_size):
    """Deterministic parameter init mirroring the module's __init__ shapes."""
    k_w, k_b = jax.random.split(key, 2)
    H, I = hidden_size, intermediate_size
    return {
        # QuantizeLinear (treated as plain linear): weight (H, I), bias (I,)
        "dense_w": jax.random.normal(k_w, (H, I), jnp.float32) * (1.0 / H ** 0.5),
        "dense_b": jax.random.normal(k_b, (I,), jnp.float32) * 0.02,
        # move / LayerNorm / RPReLU defaults per PyTorch __init__
        "move": jnp.zeros((H,), jnp.float32),
        "ln_gamma": jnp.ones((I,), jnp.float32),
        "ln_beta": jnp.zeros((I,), jnp.float32),
        "rprelu_move1": jnp.zeros((I,), jnp.float32),
        "prelu_alpha": jnp.full((I,), 0.25, jnp.float32),  # nn.PReLU default
        "rprelu_move2": jnp.zeros((I,), jnp.float32),
    }


def _reference_f32(hidden_states, params, eps=1e-12):
    """Pure-JAX, all-f32 reference faithful to the PyTorch forward."""
    x = hidden_states.astype(jnp.float32)
    W = params["dense_w"].astype(jnp.float32)
    H = x.shape[-1]
    I = W.shape[1]
    ratio = I // H
    y = (x + params["move"]) @ W + params["dense_b"]
    mean = jnp.mean(y, axis=-1, keepdims=True)
    var = jnp.mean((y - mean) ** 2, axis=-1, keepdims=True)
    ln = (y - mean) * lax.rsqrt(var + eps) * params["ln_gamma"] + params["ln_beta"]
    out = ln + jnp.concatenate([x] * ratio, axis=-1)
    z = out - params["rprelu_move1"]
    return jnp.where(z > 0, z, params["prelu_alpha"] * z) + params["rprelu_move2"]


def _reference_matched(hidden_states, params, eps=1e-12):
    """Reference matching the kernel's numerics (bf16 MXU operands, folded
    bias, two-pass LN, full-f32 residual) for a tight-tolerance check."""
    x = hidden_states.astype(jnp.float32)
    W = params["dense_w"].astype(jnp.float32)
    H = x.shape[-1]
    I = W.shape[1]
    ratio = I // H
    b_eff = params["dense_b"] + params["move"] @ W
    y = jnp.dot(x.astype(jnp.bfloat16), W.astype(jnp.bfloat16),
                preferred_element_type=jnp.float32) + b_eff
    mean = jnp.mean(y, axis=-1, keepdims=True)
    var = jnp.mean((y - mean) ** 2, axis=-1, keepdims=True)
    ln = (y - mean) * lax.rsqrt(var + eps) * params["ln_gamma"] + params["ln_beta"]
    out = ln + jnp.concatenate([x] * ratio, axis=-1)
    z = out - params["rprelu_move1"]
    return jnp.where(z > 0, z, params["prelu_alpha"] * z) + params["rprelu_move2"]


if __name__ == "__main__":
    # Small shapes: batch=2, seq=8, hidden=32, intermediate=128 (expansion 4x)
    B, S, H, I = 2, 8, 32, 128
    key = jax.random.PRNGKey(0)
    k_x, k_p, k_m, k_m1, k_m2, k_a, k_g, k_bt = jax.random.split(key, 8)
    hidden_states = jax.random.normal(k_x, (B, S, H), jnp.float32)
    params = init_params(k_p, H, I)
    # Randomize the shift / affine params so the bias-folding and RPReLU paths
    # are actually exercised (the PyTorch init would leave them all zero).
    params["move"] = 0.1 * jax.random.normal(k_m, (H,), jnp.float32)
    params["rprelu_move1"] = 0.1 * jax.random.normal(k_m1, (I,), jnp.float32)
    params["rprelu_move2"] = 0.1 * jax.random.normal(k_m2, (I,), jnp.float32)
    params["prelu_alpha"] = 0.25 + 0.05 * jax.random.normal(k_a, (I,), jnp.float32)
    params["ln_gamma"] = 1.0 + 0.1 * jax.random.normal(k_g, (I,), jnp.float32)
    params["ln_beta"] = 0.1 * jax.random.normal(k_bt, (I,), jnp.float32)

    out = vit_intermediate(hidden_states, params)
    out = jax.block_until_ready(out)
    assert out.shape == (B, S, I)

    # Tight check against a reference with the same numerics as the kernel.
    ref_m = _reference_matched(hidden_states, params)
    assert jnp.allclose(out, ref_m, atol=1e-3, rtol=1e-3), \
        float(jnp.max(jnp.abs(out - ref_m)))

    # Looser check against the all-f32, PyTorch-faithful reference
    # (difference is bf16 rounding of the MXU operands).
    ref_f = _reference_f32(hidden_states, params)
    assert jnp.allclose(out, ref_f, atol=5e-2, rtol=5e-2), \
        float(jnp.max(jnp.abs(out - ref_f)))

    print("KERNEL_OK")
</pallas_src>

<mosaic_0001>
module attributes {stable_mosaic.version = 11 : i64} {
  func.func @_vit_intermediate_kernel(%arg0: i32, %arg1: memref<8x32xf32, #tpu.memory_space<vmem>>, %arg2: memref<32x128xbf16, #tpu.memory_space<vmem>>, %arg3: memref<8x128xf32, #tpu.memory_space<vmem>>, %arg4: memref<8x128xf32, #tpu.memory_space<vmem>>) attributes {dimension_semantics = [#tpu.dimension_semantics<parallel>], iteration_bounds = array<i64: 2>, scalar_prefetch = 0 : i64, scratch_operands = 0 : i64, tpu.core_type = #tpu.core_type<tc>, window_params = [{transform_indices = @transform_0, window_bounds = array<i64: 8, 32>}, {pipeline_mode = #tpu.pipeline_mode<synchronous>, transform_indices = @transform_1, window_bounds = array<i64: 32, 128>}, {pipeline_mode = #tpu.pipeline_mode<synchronous>, transform_indices = @transform_2, window_bounds = array<i64: 8, 128>}, {transform_indices = @transform_3, window_bounds = array<i64: 8, 128>}]} {
    %c0 = arith.constant 0 : index
    %c0_0 = arith.constant 0 : index
    %0 = vector.load %arg1[%c0, %c0_0] : memref<8x32xf32, #tpu.memory_space<vmem>>, vector<8x32xf32>
    %1 = arith.truncf %0 : vector<8x32xf32> to vector<8x32xbf16>
    %c0_1 = arith.constant 0 : index
    %c0_2 = arith.constant 0 : index
    %2 = vector.load %arg2[%c0_1, %c0_2] : memref<32x128xbf16, #tpu.memory_space<vmem>>, vector<32x128xbf16>
    %cst = arith.constant dense<0.000000e+00> : vector<8x128xf32>
    %3 = tpu.matmul %1, %2, %cst {dimension_numbers = #tpu.dot_dimension_numbers<[1], [0], [0], [1], [0, 0, 1, 1], [], []>} : vector<8x32xbf16>, vector<32x128xbf16>, vector<8x128xf32> -> vector<8x128xf32>
    %c0_3 = arith.constant 0 : index
    %c0_4 = arith.constant 0 : index
    %4 = vector.load %arg3[%c0_3, %c0_4] : memref<8x128xf32, #tpu.memory_space<vmem>>, vector<1x128xf32>
    %5 = vector.broadcast %4 : vector<1x128xf32> to vector<8x128xf32>
    %6 = arith.addf %3, %5 : vector<8x128xf32>
    %cst_5 = arith.constant dense<0.000000e+00> : vector<8xf32>
    %7 = vector.multi_reduction <add>, %6, %cst_5 [1] : vector<8x128xf32> to vector<8xf32>
    %8 = vector.shape_cast %7 : vector<8xf32> to vector<8x1xf32>
    %cst_6 = arith.constant 7.812500e-03 : f32
    %9 = vector.broadcast %cst_6 : f32 to vector<8x1xf32>
    %10 = arith.mulf %8, %9 : vector<8x1xf32>
    %11 = vector.broadcast %10 : vector<8x1xf32> to vector<8x128xf32>
    %12 = arith.subf %6, %11 : vector<8x128xf32>
    %13 = arith.mulf %12, %12 : vector<8x128xf32>
    %cst_7 = arith.constant dense<0.000000e+00> : vector<8xf32>
    %14 = vector.multi_reduction <add>, %13, %cst_7 [1] : vector<8x128xf32> to vector<8xf32>
    %15 = vector.shape_cast %14 : vector<8xf32> to vector<8x1xf32>
    %cst_8 = arith.constant 7.812500e-03 : f32
    %16 = vector.broadcast %cst_8 : f32 to vector<8x1xf32>
    %17 = arith.mulf %15, %16 : vector<8x1xf32>
    %cst_9 = arith.constant 9.99999996E-13 : f32
    %18 = vector.broadcast %cst_9 : f32 to vector<8x1xf32>
    %19 = arith.addf %17, %18 : vector<8x1xf32>
    %20 = math.rsqrt %19 : vector<8x1xf32>
    %c1 = arith.constant 1 : index
    %c0_10 = arith.constant 0 : index
    %21 = vector.load %arg3[%c1, %c0_10] : memref<8x128xf32, #tpu.memory_space<vmem>>, vector<1x128xf32>
    %c2 = arith.constant 2 : index
    %c0_11 = arith.constant 0 : index
    %22 = vector.load %arg3[%c2, %c0_11] : memref<8x128xf32, #tpu.memory_space<vmem>>, vector<1x128xf32>
    %c3 = arith.constant 3 : index
    %c0_12 = arith.constant 0 : index
    %23 = vector.load %arg3[%c3, %c0_12] : memref<8x128xf32, #tpu.memory_space<vmem>>, vector<1x128xf32>
    %c4 = arith.constant 4 : index
    %c0_13 = arith.constant 0 : index
    %24 = vector.load %arg3[%c4, %c0_13] : memref<8x128xf32, #tpu.memory_space<vmem>>, vector<1x128xf32>
    %25 = tpu.concatenate %0, %0, %0, %0 in 1 : vector<8x32xf32>, vector<8x32xf32>, vector<8x32xf32>, vector<8x32xf32> -> vector<8x128xf32>
    %26 = vector.broadcast %20 : vector<8x1xf32> to vector<8x128xf32>
    %27 = arith.mulf %12, %26 : vector<8x128xf32>
    %28 = vector.broadcast %21 : vector<1x128xf32> to vector<8x128xf32>
    %29 = arith.mulf %27, %28 : vector<8x128xf32>
    %30 = vector.broadcast %22 : vector<1x128xf32> to vector<8x128xf32>
    %31 = arith.addf %29, %30 : vector<8x128xf32>
    %32 = arith.addf %31, %25 : vector<8x128xf32>
    %cst_14 = arith.constant 0.000000e+00 : f32
    %33 = vector.broadcast %cst_14 : f32 to vector<8x128xf32>
    %34 = arith.cmpf ogt, %32, %33 : vector<8x128xf32>
    %35 = vector.broadcast %23 : vector<1x128xf32> to vector<8x128xf32>
    %36 = arith.mulf %35, %32 : vector<8x128xf32>
    %37 = arith.select %34, %32, %36 : vector<8x128xi1>, vector<8x128xf32>
    %38 = vector.broadcast %24 : vector<1x128xf32> to vector<8x128xf32>
    %39 = arith.addf %37, %38 : vector<8x128xf32>
    %c0_15 = arith.constant 0 : index
    %c0_16 = arith.constant 0 : index
    %40 = vector.load %arg4[%c0_15, %c0_16] : memref<8x128xf32, #tpu.memory_space<vmem>>, vector<8x128xf32>
    tpu.vector_store %arg4[%c0_15, %c0_16], %39 {strides = array<i32>} : memref<8x128xf32, #tpu.memory_space<vmem>>, vector<8x128xf32>,
    return
  }
  func.func @transform_0(%arg0: i32) -> (i32, i32) {
    %c0_i32 = arith.constant 0 : i32
    %c0_i32_0 = arith.constant 0 : i32
    return %arg0, %c0_i32 : i32, i32
  }
  func.func @transform_1(%arg0: i32) -> (i32, i32) {
    %c0_i32 = arith.constant 0 : i32
    %c0_i32_0 = arith.constant 0 : i32
    %c0_i32_1 = arith.constant 0 : i32
    return %c0_i32, %c0_i32_0 : i32, i32
  }
  func.func @transform_2(%arg0: i32) -> (i32, i32) {
    %c0_i32 = arith.constant 0 : i32
    %c0_i32_0 = arith.constant 0 : i32
    %c0_i32_1 = arith.constant 0 : i32
    return %c0_i32, %c0_i32_0 : i32, i32
  }
  func.func @transform_3(%arg0: i32) -> (i32, i32) {
    %c0_i32 = arith.constant 0 : i32
    %c0_i32_0 = arith.constant 0 : i32
    return %arg0, %c0_i32 : i32, i32
  }
}

module attributes {stable_mosaic.version = 11 : i64} {
  func.func @_vit_intermediate_kernel(%arg0: i32, %arg1: memref<8x32xf32, #tpu.memory_space<vmem>>, %arg2: memref<32x128xbf16, #tpu.memory_space<vmem>>, %arg3: memref<8x128xf32, #tpu.memory_space<vmem>>, %arg4: memref<8x128xf32, #tpu.memory_space<vmem>>) attributes {dimension_semantics = [#tpu.dimension_semantics<parallel>], iteration_bounds = array<i64: 2>, scalar_prefetch = 0 : i64, scratch_operands = 0 : i64, tpu.core_type = #tpu.core_type<tc>, window_params = [{transform_indices = @transform_0, window_bounds = array<i64: 8, 32>}, {pipeline_mode = #tpu.pipeline_mode<synchronous>, transform_indices = @transform_1, window_bounds = array<i64: 32, 128>}, {pipeline_mode = #tpu.pipeline_mode<synchronous>, transform_indices = @transform_2, window_bounds = array<i64: 8, 128>}, {transform_indices = @transform_3, window_bounds = array<i64: 8, 128>}]} {
    %c0 = arith.constant 0 : index
    %c0_0 = arith.constant 0 : index
    %0 = vector.load %arg1[%c0, %c0_0] : memref<8x32xf32, #tpu.memory_space<vmem>>, vector<8x32xf32>
    %1 = arith.truncf %0 : vector<8x32xf32> to vector<8x32xbf16>
    %c0_1 = arith.constant 0 : index
    %c0_2 = arith.constant 0 : index
    %2 = vector.load %arg2[%c0_1, %c0_2] : memref<32x128xbf16, #tpu.memory_space<vmem>>, vector<32x128xbf16>
    %cst = arith.constant dense<0.000000e+00> : vector<8x128xf32>
    %3 = tpu.matmul %1, %2, %cst {dimension_numbers = #tpu.dot_dimension_numbers<[1], [0], [0], [1], [0, 0, 1, 1], [], []>} : vector<8x32xbf16>, vector<32x128xbf16>, vector<8x128xf32> -> vector<8x128xf32>
    %c0_3 = arith.constant 0 : index
    %c0_4 = arith.constant 0 : index
    %4 = vector.load %arg3[%c0_3, %c0_4] : memref<8x128xf32, #tpu.memory_space<vmem>>, vector<1x128xf32>
    %5 = vector.broadcast %4 : vector<1x128xf32> to vector<8x128xf32>
    %6 = arith.addf %3, %5 : vector<8x128xf32>
    %cst_5 = arith.constant dense<0.000000e+00> : vector<8xf32>
    %7 = vector.multi_reduction <add>, %6, %cst_5 [1] : vector<8x128xf32> to vector<8xf32>
    %8 = vector.shape_cast %7 : vector<8xf32> to vector<8x1xf32>
    %cst_6 = arith.constant 7.812500e-03 : f32
    %9 = vector.broadcast %cst_6 : f32 to vector<8x1xf32>
    %10 = arith.mulf %8, %9 : vector<8x1xf32>
    %11 = vector.broadcast %10 : vector<8x1xf32> to vector<8x128xf32>
    %12 = arith.subf %6, %11 : vector<8x128xf32>
    %13 = arith.mulf %12, %12 : vector<8x128xf32>
    %cst_7 = arith.constant dense<0.000000e+00> : vector<8xf32>
    %14 = vector.multi_reduction <add>, %13, %cst_7 [1] : vector<8x128xf32> to vector<8xf32>
    %15 = vector.shape_cast %14 : vector<8xf32> to vector<8x1xf32>
    %cst_8 = arith.constant 7.812500e-03 : f32
    %16 = vector.broadcast %cst_8 : f32 to vector<8x1xf32>
    %17 = arith.mulf %15, %16 : vector<8x1xf32>
    %cst_9 = arith.constant 9.99999996E-13 : f32
    %18 = vector.broadcast %cst_9 : f32 to vector<8x1xf32>
    %19 = arith.addf %17, %18 : vector<8x1xf32>
    %20 = math.rsqrt %19 : vector<8x1xf32>
    %c1 = arith.constant 1 : index
    %c0_10 = arith.constant 0 : index
    %21 = vector.load %arg3[%c1, %c0_10] : memref<8x128xf32, #tpu.memory_space<vmem>>, vector<1x128xf32>
    %c2 = arith.constant 2 : index
    %c0_11 = arith.constant 0 : index
    %22 = vector.load %arg3[%c2, %c0_11] : memref<8x128xf32, #tpu.memory_space<vmem>>, vector<1x128xf32>
    %c3 = arith.constant 3 : index
    %c0_12 = arith.constant 0 : index
    %23 = vector.load %arg3[%c3, %c0_12] : memref<8x128xf32, #tpu.memory_space<vmem>>, vector<1x128xf32>
    %c4 = arith.constant 4 : index
    %c0_13 = arith.constant 0 : index
    %24 = vector.load %arg3[%c4, %c0_13] : memref<8x128xf32, #tpu.memory_space<vmem>>, vector<1x128xf32>
    %25 = tpu.concatenate %0, %0, %0, %0 in 1 : vector<8x32xf32>, vector<8x32xf32>, vector<8x32xf32>, vector<8x32xf32> -> vector<8x128xf32>
    %26 = vector.broadcast %20 : vector<8x1xf32> to vector<8x128xf32>
    %27 = arith.mulf %12, %26 : vector<8x128xf32>
    %28 = vector.broadcast %21 : vector<1x128xf32> to vector<8x128xf32>
    %29 = arith.mulf %27, %28 : vector<8x128xf32>
    %30 = vector.broadcast %22 : vector<1x128xf32> to vector<8x128xf32>
    %31 = arith.addf %29, %30 : vector<8x128xf32>
    %32 = arith.addf %31, %25 : vector<8x128xf32>
    %cst_14 = arith.constant 0.000000e+00 : f32
    %33 = vector.broadcast %cst_14 : f32 to vector<8x128xf32>
    %34 = arith.cmpf ogt, %32, %33 : vector<8x128xf32>
    %35 = vector.broadcast %23 : vector<1x128xf32> to vector<8x128xf32>
    %36 = arith.mulf %35, %32 : vector<8x128xf32>
    %37 = arith.select %34, %32, %36 : vector<8x128xi1>, vector<8x128xf32>
    %38 = vector.broadcast %24 : vector<1x128xf32> to vector<8x128xf32>
    %39 = arith.addf %37, %38 : vector<8x128xf32>
    %c0_15 = arith.constant 0 : index
    %c0_16 = arith.constant 0 : index
    %40 = vector.load %arg4[%c0_15, %c0_16] : memref<8x128xf32, #tpu.memory_space<vmem>>, vector<8x128xf32>
    tpu.vector_store %arg4[%c0_15, %c0_16], %39 {strides = array<i32>} : memref<8x128xf32, #tpu.memory_space<vmem>>, vector<8x128xf32>,
    return
  }
  func.func @transform_0(%arg0: i32) -> (i32, i32) {
    %c0_i32 = arith.constant 0 : i32
    %c0_i32_0 = arith.constant 0 : i32
    return %arg0, %c0_i32 : i32, i32
  }
  func.func @transform_1(%arg0: i32) -> (i32, i32) {
    %c0_i32 = arith.constant 0 : i32
    %c0_i32_0 = arith.constant 0 : i32
    %c0_i32_1 = arith.constant 0 : i32
    return %c0_i32, %c0_i32_0 : i32, i32
  }
  func.func @transform_2(%arg0: i32) -> (i32, i32) {
    %c0_i32 = arith.constant 0 : i32
    %c0_i32_0 = arith.constant 0 : i32
    %c0_i32_1 = arith.constant 0 : i32
    return %c0_i32, %c0_i32_0 : i32, i32
  }
  func.func @transform_3(%arg0: i32) -> (i32, i32) {
    %c0_i32 = arith.constant 0 : i32
    %c0_i32_0 = arith.constant 0 : i32
    return %arg0, %c0_i32 : i32, i32
  }
}

</mosaic_0001>

<llo_original>
// kernel: tpu_custom_call.1
$region0: #{tpu_custom_call.1}
  #allocation0 [shape = 'u32[]', space=smem, size = 0x4, offset = 0x4, fixed_abs, tag = 'smem constant byte address 0x4 - core index']
  #allocation1 [shape = 'u32[144,128]{1,0:T(1,128)}', space=vmem, size = 0x12000, scoped, tag = 'internal scratch']
  %s0 = inlined_call_operand.hbm [shape: f32[16,32], index: 0, kind: input, shape index: {}]
  %s1 = inlined_call_operand.hbm [shape: bf16[32,128], index: 1, kind: input, shape index: {}]
  %s2 = inlined_call_operand.hbm [shape: f32[8,128], index: 2, kind: input, shape index: {}]
  %s3 = inlined_call_operand.hbm [shape: f32[16,128], index: 3, kind: output, shape index: {}]
  %s4 = sld [smem:[#allocation0]]
  $region57: #{tpu_custom_call.1} parent=0
    _
  %s6 = ssub.s32 1, %s4
  %s7 = scalar_select 0, %s6, %s4
  $region1: #{tpu_custom_call.1} parent=0
    #allocation2 [shape = 'u8[8192]{0}', space=vmem, size = 0x2000, scoped, tag = 'input window, operand 0']
    #allocation3 [shape = 's32[2]{0}', space=sflag, size = 0x8, scoped, tag = 'scoped memory for tpu_custom_call.1']
    #allocation4 [shape = 's32[2]{0}', space=sflag, size = 0x8, scoped, tag = 'scoped memory for tpu_custom_call.1']
    #allocation5 [shape = 'u8[8192]{0}', space=vmem, size = 0x2000, scoped, tag = 'input window, operand 1, single buffered']
    #allocation6 [shape = 's32[1]{0}', space=sflag, size = 0x4, scoped, tag = 'scoped memory for tpu_custom_call.1']
    #allocation7 [shape = 'u8[4096]{0}', space=vmem, size = 0x1000, scoped, tag = 'input window, operand 2, single buffered']
    #allocation8 [shape = 'u8[8192]{0}', space=vmem, size = 0x2000, scoped, tag = 'output window, operand 0']
    %8 = vsyncpa [#allocation3], 0
    %s9 = scalar_lea.sflag [#allocation3], 1
    %10 = vsyncpa %s9, 0
    %11 = vsyncpa [#allocation6], 0
    %12 = vsyncpa [#allocation4], 0
    %s13 = scalar_lea.sflag [#allocation4], 1
    %14 = vsyncpa %s13, 0
    loop: start=0, step=1, limit=4
    $region2: #{tpu_custom_call.1} parent=1 // loop_pre_header
      _
    $region3: #{tpu_custom_call.1} parent=1 // loop_header
      %s16 = sphi 0, %s20
      %p17 = scmp.ge.s32.totalorder %s16, 4
      %s26 = sphi 0, %s28
      %s29 = sphi 0, %s26
      %s30 = sphi 0, %s29
      %s46 = sphi 0, %s30
      %s50 = sphi 0, %s50
      %s52 = sphi 0, %s50
      %s53 = sphi 0, %s52
      %s67 = sphi 0, %s53
      %s71 = sphi 0, %s71
      %s73 = sphi 0, %s71
      %s74 = sphi 0, %s73
      %s88 = sphi 0, %s74
      %s94 = sphi 0, %s96
      %s97 = sphi 0, %s94
      %s98 = sphi 0, %s97
      %s114 = sphi 0, %s98
    $region4: #{tpu_custom_call.1} parent=1 // loop_header_branch
      %19 = sbr.rel (%p17) target = $region8
    $region5: #{tpu_custom_call.1} parent=1 // loop_body
      %s21 = ssub.s32 %s16, 1
      %s22 = ssub.s32 %s16, 2
      %s23 = sadd.s32 %s16, 1
      %s24 = ssub.s32 %s16, %s23
      %p25 = scmp.eq.s32.totalorder %s24, 0
      %s27 = sadd.s32 %s26, 1
      %s28 = scalar_select %p25, %s26, %s27
      %p31 = pneg %p25
      %p32 = scmp.eq.s32.totalorder %s16, 1
      %p33 = por %p31, %p32
      %p34 = scmp.ne.s32.totalorder %s26, %s29
      %p35 = scmp.eq.s32.totalorder %s16, 0
      %p36 = por %p34, %p35
      %p37 = scmp.ne.s32.totalorder %s26, %s29
      %p38 = scmp.eq.s32.totalorder %s21, 1
      %p39 = por %p37, %p38
      %p40 = scmp.ne.s32.totalorder %s29, %s30
      %p41 = scmp.eq.s32.totalorder %s21, 0
      %p42 = por %p40, %p41
      %p43 = scmp.ne.s32.totalorder %s29, %s30
      %p44 = scmp.eq.s32.totalorder %s22, 1
      %p45 = por %p43, %p44
      %p47 = scmp.ne.s32.totalorder %s30, %s46
      %p48 = scmp.eq.s32.totalorder %s22, 0
      %p49 = por %p47, %p48
      %s51 = sadd.s32 %s50, 1
      %p54 = scmp.eq.s32.totalorder %s16, 1
      %p55 = scmp.ne.s32.totalorder %s50, %s52
      %p56 = scmp.eq.s32.totalorder %s16, 0
      %p57 = por %p55, %p56
      %p58 = scmp.ne.s32.totalorder %s50, %s52
      %p59 = scmp.eq.s32.totalorder %s21, 1
      %p60 = por %p58, %p59
      %p61 = scmp.ne.s32.totalorder %s52, %s53
      %p62 = scmp.eq.s32.totalorder %s21, 0
      %p63 = por %p61, %p62
      %p64 = scmp.ne.s32.totalorder %s52, %s53
      %p65 = scmp.eq.s32.totalorder %s22, 1
      %p66 = por %p64, %p65
      %p68 = scmp.ne.s32.totalorder %s53, %s67
      %p69 = scmp.eq.s32.totalorder %s22, 0
      %p70 = por %p68, %p69
      %s72 = sadd.s32 %s71, 1
      %p75 = scmp.eq.s32.totalorder %s16, 1
      %p76 = scmp.ne.s32.totalorder %s71, %s73
      %p77 = scmp.eq.s32.totalorder %s16, 0
      %p78 = por %p76, %p77
      %p79 = scmp.ne.s32.totalorder %s71, %s73
      %p80 = scmp.eq.s32.totalorder %s21, 1
      %p81 = por %p79, %p80
      %p82 = scmp.ne.s32.totalorder %s73, %s74
      %p83 = scmp.eq.s32.totalorder %s21, 0
      %p84 = por %p82, %p83
      %p85 = scmp.ne.s32.totalorder %s73, %s74
      %p86 = scmp.eq.s32.totalorder %s22, 1
      %p87 = por %p85, %p86
      %p89 = scmp.ne.s32.totalorder %s74, %s88
      %p90 = scmp.eq.s32.totalorder %s22, 0
      %p91 = por %p89, %p90
      %s92 = ssub.s32 %s16, %s23
      %p93 = scmp.eq.s32.totalorder %s92, 0
      %s95 = sadd.s32 %s94, 1
      %s96 = scalar_select %p93, %s94, %s95
      %p99 = pneg %p93
      %p100 = scmp.eq.s32.totalorder %s16, 1
      %p101 = por %p99, %p100
      %p102 = scmp.ne.s32.totalorder %s94, %s97
      %p103 = scmp.eq.s32.totalorder %s16, 0
      %p104 = por %p102, %p103
      %p105 = scmp.ne.s32.totalorder %s94, %s97
      %p106 = scmp.eq.s32.totalorder %s21, 1
      %p107 = por %p105, %p106
      %p108 = scmp.ne.s32.totalorder %s97, %s98
      %p109 = scmp.eq.s32.totalorder %s21, 0
      %p110 = por %p108, %p109
      %p111 = scmp.ne.s32.totalorder %s97, %s98
      %p112 = scmp.eq.s32.totalorder %s22, 1
      %p113 = por %p111, %p112
      %p115 = scmp.ne.s32.totalorder %s98, %s114
      %p116 = scmp.eq.s32.totalorder %s22, 0
      %p117 = por %p115, %p116
      %p118 = scmp.le.s32.totalorder 1, %s16
      %p119 = scmp.lt.s32.totalorder %s16, 3
      %p120 = pnand %p118, %p119
      %p121 = pneg %p120
      // Predicated region
      $region9: #{tpu_custom_call.1} parent=5 // pred_check
        _
      $region10: #{tpu_custom_call.1} parent=5 // pred_check_branch
        %123 = sbr.rel (%p120) target = $region12
      $region11: #{tpu_custom_call.1} parent=5 // pred_region
        %s124 = ssub.s32 %s16, 1
        // Predicated region
        $region13: #{tpu_custom_call.1} parent=11 // pred_check
          %p125 = pneg %p63
        $region14: #{tpu_custom_call.1} parent=11 // pred_check_branch
          %127 = sbr.rel (%p125) target = $region16
        $region15: #{tpu_custom_call.1} parent=11 // pred_region
          %s129 = ssub.s32 256, 256
          %130 = vsyncadd [#allocation6], %s129
          %s131 = sshll.u32 [#allocation5], 4
          %s132 = int_to_ptr.vmem [resolvable:$true] %s131
          %137 = dma.hbm_to_vmem [thread:$0]  %s1, 256, %s132, [#allocation6], 64, 64, 4
        $region16: #{tpu_custom_call.1} parent=11 // pred_fallthru
          _
        // Predicated region
        $region17: #{tpu_custom_call.1} parent=11 // pred_check
          %p138 = pneg %p84
        $region18: #{tpu_custom_call.1} parent=11 // pred_check_branch
          %140 = sbr.rel (%p138) target = $region20
        $region19: #{tpu_custom_call.1} parent=11 // pred_region
          %s142 = ssub.s32 128, 128
          %143 = vsyncadd [#allocation6], %s142
          %s145 = sshll.u32 [#allocation7], 4
          %s146 = int_to_ptr.vmem [resolvable:$true] %s145
          %148 = dma.hbm_to_vmem [thread:$0]  %s2, 128, %s146, [#allocation6]
        $region20: #{tpu_custom_call.1} parent=11 // pred_fallthru
          _
      $region12: #{tpu_custom_call.1} parent=5 // pred_fallthru
        _
      %p149 = scmp.lt.s32.totalorder %s16, 2
      // Predicated region
      $region21: #{tpu_custom_call.1} parent=5 // pred_check
        %p150 = pneg %p149
      $region22: #{tpu_custom_call.1} parent=5 // pred_check_branch
        %152 = sbr.rel (%p150) target = $region24
      $region23: #{tpu_custom_call.1} parent=5 // pred_region
        // Predicated region
        $region25: #{tpu_custom_call.1} parent=23 // pred_check
          %p153 = pneg %p36
        $region26: #{tpu_custom_call.1} parent=23 // pred_check_branch
          %155 = sbr.rel (%p153) target = $region28
        $region27: #{tpu_custom_call.1} parent=23 // pred_region
          %s156 = sand.u32 %s26, 1
          %s157 = scalar_lea.sflag [#allocation3], %s156
          %s158 = sand.u32 %s26, 1
          %s159 = smul.addr %s158, 8
          %s160 = scalar_lea.vmem [#allocation2], %s159
          %s162 = ssub.s32 128, 128
          %163 = vsyncadd %s157, %s162
          %s164 = smul.addr %s16, 128
          %s165 = scalar_lea.hbm %s0, %s164
          %s167 = sshll.u32 %s160, 4
          %s168 = int_to_ptr.vmem [resolvable:$true] %s167
          %170 = dma.hbm_to_vmem [thread:$0]  %s165, 128, %s168, %s157
        $region28: #{tpu_custom_call.1} parent=23 // pred_fallthru
          _
      $region24: #{tpu_custom_call.1} parent=5 // pred_fallthru
        _
      %p171 = scmp.le.s32.totalorder 1, %s16
      %p172 = scmp.lt.s32.totalorder %s16, 3
      %p173 = pnand %p171, %p172
      %p174 = pneg %p173
      // Predicated region
      $region29: #{tpu_custom_call.1} parent=5 // pred_check
        _
      $region30: #{tpu_custom_call.1} parent=5 // pred_check_branch
        %176 = sbr.rel (%p173) target = $region32
      $region31: #{tpu_custom_call.1} parent=5 // pred_region
        %s177 = ssub.s32 %s16, 1
        %s178 = sand.u32 %s29, 1
        %s179 = scalar_lea.sflag [#allocation3], %s178
        %s180 = sand.u32 %s29, 1
        %s181 = smul.addr %s180, 8
        %s182 = scalar_lea.vmem [#allocation2], %s181
        // Predicated region
        $region33: #{tpu_custom_call.1} parent=31 // pred_check
          %p183 = pneg %p42
        $region34: #{tpu_custom_call.1} parent=31 // pred_check_branch
          %185 = sbr.rel (%p183) target = $region36
        $region35: #{tpu_custom_call.1} parent=31 // pred_region
          %186 = dma.done %s179, 128
        $region36: #{tpu_custom_call.1} parent=31 // pred_fallthru
          _
        // Predicated region
        $region37: #{tpu_custom_call.1} parent=31 // pred_check
          %p187 = pneg %p63
        $region38: #{tpu_custom_call.1} parent=31 // pred_check_branch
          %189 = sbr.rel (%p187) target = $region40
        $region39: #{tpu_custom_call.1} parent=31 // pred_region
          %190 = dma.done [#allocation6], 256
        $region40: #{tpu_custom_call.1} parent=31 // pred_fallthru
          _
        // Predicated region
        $region41: #{tpu_custom_call.1} parent=31 // pred_check
          %p191 = pneg %p84
        $region42: #{tpu_custom_call.1} parent=31 // pred_check_branch
          %193 = sbr.rel (%p191) target = $region44
        $region43: #{tpu_custom_call.1} parent=31 // pred_region
          %194 = dma.done [#allocation6], 128
        $region44: #{tpu_custom_call.1} parent=31 // pred_fallthru
          _
        %s195 = sand.u32 %s29, 1
        %s196 = scalar_lea.sflag [#allocation3], %s195
        %s197 = sand.u32 %s29, 1
        %s198 = smul.addr %s197, 8
        %s199 = scalar_lea.vmem [#allocation2], %s198
        %p200 = pneg %p42
        %p201 = pneg %p39
        %p202 = pneg %p63
        %p203 = pneg %p60
        %p204 = pneg %p84
        %p205 = pneg %p81
        %p206 = pneg %p110
        %p207 = pneg %p107
        %s208 = sand.u32 %s97, 1
        %s209 = scalar_lea.sflag [#allocation4], %s208
        %s210 = sand.u32 %s97, 1
        %s211 = smul.addr %s210, 8
        %s212 = scalar_lea.vmem [#allocation8], %s211
        %v214 = vld [vmem:[%s182] sm:$0xff]
        %v215 = vpack.c.bf16 %v214, %v214
        %v216 = vld [vmem:[#allocation5] sm:$0xf]
        %v217 = vld [vmem:[#allocation5 + $0x4] sm:$0xf]
        %v218 = vld [vmem:[#allocation5 + $0x8] sm:$0xf]
        %v219 = vld [vmem:[#allocation5 + $0xc] sm:$0xf]
        %v220 = vld [vmem:[#allocation7] sm:$0x1]
        %v221 = vlaneseq
        %v222 = vshrl.u32 %v221, 7
        %v223 = vsub.s32 0, %v222
        %v224 = vrot.slane %v220, %v223
        %v229 = vunpack.c.l.b16 %v216
        %v230 = vunpack.c.l.b16 %v217
        %v231 = vunpack.c.l.b16 %v218
        %v232 = vunpack.c.l.b16 %v219
        %v233 = vpack.c.b16 %v230, %v229
        %v234 = vpack.c.b16 %v232, %v231
        %vm237 = vcmask 261120
        %v239 = vsel %vm237, %v215, 0
        %241 = vmatprep.subr.bf16.mxu0 0
        %242 = vmatpush1.bf16.msra.mxu0 0
        %243 = vmatprep.subr.bf16.mxu0 0
        %244 = vmatpush1.bf16.msra.mxu0 0
        %245 = vmatprep.subr.bf16.mxu0 0
        %246 = vmatpush1.bf16.msra.mxu0 0
        %247 = vmatprep.subr.bf16.mxu0 0
        %248 = vmatpush1.bf16.msra.mxu0 0
        %249 = vmatprep.subr.bf16.mxu0 0
        %250 = vmatpush1.bf16.msra.mxu0 0
        %251 = vmatprep.subr.bf16.mxu0 0
        %252 = vmatpush1.bf16.msra.mxu0 0
        %253 = vmatprep.subr.bf16.mxu0 0
        %254 = vmatpush1.bf16.msra.mxu0 %v234
        %255 = vmatprep.subr.bf16.mxu0 0
        %256 = vmatpush1.bf16.msra.mxu0 %v233
        %257 = vmatprep.subr.bf16.mxu0 0
        %258 = vmatpush2.bf16.msra.mxu0 0
        %259 = vmatprep.subr.bf16.mxu0 0
        %260 = vmatpush2.bf16.msra.mxu0 0
        %261 = vmatprep.subr.bf16.mxu0 0
        %262 = vmatpush2.bf16.msra.mxu0 0
        %263 = vmatprep.subr.bf16.mxu0 0
        %264 = vmatpush2.bf16.msra.mxu0 0
        %265 = vmatprep.subr.bf16.mxu0 0
        %266 = vmatpush2.bf16.msra.mxu0 0
        %267 = vmatprep.subr.bf16.mxu0 0
        %268 = vmatpush2.bf16.msra.mxu0 0
        %269 = vmatprep.subr.bf16.mxu0 0
        %270 = vmatpush2.bf16.msra.mxu0 0
        %271 = vmatprep.subr.bf16.mxu0 0
        %272 = vmatpush2.bf16.msra.mxu0 0
        %273 = vmatprep.mubr.bf16.mxu0 0
        %274 = vmatmul.mubr.bf16.gmra.mxu0 %v239
        %v275 = vpop.f32.mrf.mxu0
        %v276 = vadd.f32 %v224, %v275
        %v277 = vpop.f32.mrf.mxu0
        %v278 = vpop.f32.mrf.mxu0
        %v279 = vpop.f32.mrf.mxu0
        %280 = vdwg.mxu0
        %281 = vadd.xlane.f32.xlu0 %v276
        %v282 = vpop.xlane.xlu0 %281
        %v283 = vmul.f32 %v282, 0.0078125
        %v284 = vsub.f32 %v276, %v283
        %v285 = vmul.f32 %v284, %v284
        %286 = vadd.xlane.f32.xlu0 %v285
        %v287 = vpop.xlane.xlu0 %286
        %v288 = vmul.f32 %v287, 0.0078125
        %v289 = vadd.f32 %v288, 1e-12
        %v290 = vrsqrt.pop %v289
        %v291 = vld [vmem:[#allocation7 + $0x1] sm:$0x1]
        %v292 = vld [vmem:[#allocation7 + $0x2] sm:$0x1]
        %v293 = vld [vmem:[#allocation7 + $0x3] sm:$0x1]
        %v294 = vld [vmem:[#allocation7 + $0x4] sm:$0x1]
        %296 = vrot.lane.b32.xlu0 %v214, 32
        %v297 = vpop.permute.xlu0 %296
        %299 = vrot.lane.b32.xlu0 %v214, 64
        %v300 = vpop.permute.xlu0 %299
        %302 = vrot.lane.b32.xlu0 %v214, 96
        %v303 = vpop.permute.xlu0 %302
        %v305 = vsel %vm237, %v214, %v297
        %vm306 = vcmask 523264
        %v307 = vsel %vm306, %v305, %v300
        %vm308 = vcmask 785408
        %v309 = vsel %vm308, %v307, %v303
        %v310 = vmul.f32 %v284, %v290
        %v311 = vlaneseq
        %v312 = vshrl.u32 %v311, 7
        %v313 = vsub.s32 0, %v312
        %v314 = vrot.slane %v291, %v313
        %v315 = vmul.f32 %v310, %v314
        %v316 = vlaneseq
        %v317 = vshrl.u32 %v316, 7
        %v318 = vsub.s32 0, %v317
        %v319 = vrot.slane %v292, %v318
        %v320 = vadd.f32 %v315, %v319
        %v321 = vadd.f32 %v320, %v309
        %vm322 = vcmp.gt.f32.partialorder %v321, 0.0
        %v323 = vlaneseq
        %v324 = vshrl.u32 %v323, 7
        %v325 = vsub.s32 0, %v324
        %v326 = vrot.slane %v293, %v325
        %v327 = vmul.f32 %v326, %v321
        %v328 = vsel %vm322, %v321, %v327
        %v329 = vlaneseq
        %v330 = vshrl.u32 %v329, 7
        %v331 = vsub.s32 0, %v330
        %v332 = vrot.slane %v294, %v331
        %v333 = vadd.f32 %v328, %v332
        %334 = vst [vmem:[%s212] sm:$0xff] %v333
        %s335 = sand.u32 %s97, 1
        %s336 = scalar_lea.sflag [#allocation4], %s335
        %s337 = sand.u32 %s97, 1
        %s338 = smul.addr %s337, 8
        %s339 = scalar_lea.vmem [#allocation8], %s338
        // Predicated region
        $region45: #{tpu_custom_call.1} parent=31 // pred_check
          %p340 = pneg %p107
        $region46: #{tpu_custom_call.1} parent=31 // pred_check_branch
          %342 = sbr.rel (%p340) target = $region48
        $region47: #{tpu_custom_call.1} parent=31 // pred_region
          %s344 = ssub.s32 128, 128
          %345 = vsyncadd %s336, %s344
          %s346 = smul.addr %s21, 128
          %s347 = scalar_lea.hbm %s3, %s346
          %s349 = sshll.u32 %s339, 4
          %s350 = int_to_ptr.vmem [resolvable:$true] %s349
          %352 = dma.vmem_to_hbm [thread:$0]  %s350, 128, %s347, %s336
        $region48: #{tpu_custom_call.1} parent=31 // pred_fallthru
          _
      $region32: #{tpu_custom_call.1} parent=5 // pred_fallthru
        _
      %p353 = scmp.le.s32.totalorder 2, %s16
      // Predicated region
      $region49: #{tpu_custom_call.1} parent=5 // pred_check
        %p354 = pneg %p353
      $region50: #{tpu_custom_call.1} parent=5 // pred_check_branch
        %356 = sbr.rel (%p354) target = $region52
      $region51: #{tpu_custom_call.1} parent=5 // pred_region
        %s357 = ssub.s32 %s16, 2
        // Predicated region
        $region53: #{tpu_custom_call.1} parent=51 // pred_check
          %p358 = pneg %p113
        $region54: #{tpu_custom_call.1} parent=51 // pred_check_branch
          %360 = sbr.rel (%p358) target = $region56
        $region55: #{tpu_custom_call.1} parent=51 // pred_region
          %s361 = sand.u32 %s98, 1
          %s362 = scalar_lea.sflag [#allocation4], %s361
          %s363 = sand.u32 %s98, 1
          %s364 = smul.addr %s363, 8
          %s365 = scalar_lea.vmem [#allocation8], %s364
          %366 = dma.done %s362, 128
        $region56: #{tpu_custom_call.1} parent=51 // pred_fallthru
          _
      $region52: #{tpu_custom_call.1} parent=5 // pred_fallthru
        _
    $region6: #{tpu_custom_call.1} parent=1 // loop_footer
      %s20 = sadd.s32 1, %s16
    $region7: #{tpu_custom_call.1} parent=1 // loop_footer_branch
      %15 = sbr.rel target = $region3
    $region8: #{tpu_custom_call.1} parent=1 // loop_exit
      _
    %367 = vsyncpa [#allocation3], 1
    %s368 = scalar_lea.sflag [#allocation3], 1
    %369 = vsyncpa %s368, 1
    %370 = vsyncpa [#allocation6], 1
    %371 = vsyncpa [#allocation4], 1
    %s372 = scalar_lea.sflag [#allocation4], 1
    %373 = vsyncpa %s372, 1

// kernel: tpu_custom_call.1
$region0: #{tpu_custom_call.1}
  #allocation0 [shape = 'u32[]', space=smem, size = 0x4, offset = 0x4, fixed_abs, tag = 'smem constant byte address 0x4 - core index']
  #allocation1 [shape = 'u32[144,128]{1,0:T(1,128)}', space=vmem, size = 0x12000, scoped, tag = 'internal scratch']
  %s0 = inlined_call_operand.hbm [shape: f32[16,32], index: 0, kind: input, shape index: {}]
  %s1 = inlined_call_operand.hbm [shape: bf16[32,128], index: 1, kind: input, shape index: {}]
  %s2 = inlined_call_operand.hbm [shape: f32[8,128], index: 2, kind: input, shape index: {}]
  %s3 = inlined_call_operand.hbm [shape: f32[16,128], index: 3, kind: output, shape index: {}]
  %s4 = sld [smem:[#allocation0]]
  $region57: #{tpu_custom_call.1} parent=0
    _
  %s6 = ssub.s32 1, %s4
  %s7 = scalar_select 0, %s6, %s4
  $region1: #{tpu_custom_call.1} parent=0
    #allocation2 [shape = 'u8[8192]{0}', space=vmem, size = 0x2000, scoped, tag = 'input window, operand 0']
    #allocation3 [shape = 's32[2]{0}', space=sflag, size = 0x8, scoped, tag = 'scoped memory for tpu_custom_call.1']
    #allocation4 [shape = 's32[2]{0}', space=sflag, size = 0x8, scoped, tag = 'scoped memory for tpu_custom_call.1']
    #allocation5 [shape = 'u8[8192]{0}', space=vmem, size = 0x2000, scoped, tag = 'input window, operand 1, single buffered']
    #allocation6 [shape = 's32[1]{0}', space=sflag, size = 0x4, scoped, tag = 'scoped memory for tpu_custom_call.1']
    #allocation7 [shape = 'u8[4096]{0}', space=vmem, size = 0x1000, scoped, tag = 'input window, operand 2, single buffered']
    #allocation8 [shape = 'u8[8192]{0}', space=vmem, size = 0x2000, scoped, tag = 'output window, operand 0']
    %8 = vsyncpa [#allocation3], 0
    %s9 = scalar_lea.sflag [#allocation3], 1
    %10 = vsyncpa %s9, 0
    %11 = vsyncpa [#allocation6], 0
    %12 = vsyncpa [#allocation4], 0
    %s13 = scalar_lea.sflag [#allocation4], 1
    %14 = vsyncpa %s13, 0
    loop: start=0, step=1, limit=4
    $region2: #{tpu_custom_call.1} parent=1 // loop_pre_header
      _
    $region3: #{tpu_custom_call.1} parent=1 // loop_header
      %s16 = sphi 0, %s20
      %p17 = scmp.ge.s32.totalorder %s16, 4
      %s26 = sphi 0, %s28
      %s29 = sphi 0, %s26
      %s30 = sphi 0, %s29
      %s46 = sphi 0, %s30
      %s50 = sphi 0, %s50
      %s52 = sphi 0, %s50
      %s53 = sphi 0, %s52
      %s67 = sphi 0, %s53
      %s71 = sphi 0, %s71
      %s73 = sphi 0, %s71
      %s74 = sphi 0, %s73
      %s88 = sphi 0, %s74
      %s94 = sphi 0, %s96
      %s97 = sphi 0, %s94
      %s98 = sphi 0, %s97
      %s114 = sphi 0, %s98
    $region4: #{tpu_custom_call.1} parent=1 // loop_header_branch
      %19 = sbr.rel (%p17) target = $region8
    $region5: #{tpu_custom_call.1} parent=1 // loop_body
      %s21 = ssub.s32 %s16, 1
      %s22 = ssub.s32 %s16, 2
      %s23 = sadd.s32 %s16, 1
      %s24 = ssub.s32 %s16, %s23
      %p25 = scmp.eq.s32.totalorder %s24, 0
      %s27 = sadd.s32 %s26, 1
      %s28 = scalar_select %p25, %s26, %s27
      %p31 = pneg %p25
      %p32 = scmp.eq.s32.totalorder %s16, 1
      %p33 = por %p31, %p32
      %p34 = scmp.ne.s32.totalorder %s26, %s29
      %p35 = scmp.eq.s32.totalorder %s16, 0
      %p36 = por %p34, %p35
      %p37 = scmp.ne.s32.totalorder %s26, %s29
      %p38 = scmp.eq.s32.totalorder %s21, 1
      %p39 = por %p37, %p38
      %p40 = scmp.ne.s32.totalorder %s29, %s30
      %p41 = scmp.eq.s32.totalorder %s21, 0
      %p42 = por %p40, %p41
      %p43 = scmp.ne.s32.totalorder %s29, %s30
      %p44 = scmp.eq.s32.totalorder %s22, 1
      %p45 = por %p43, %p44
      %p47 = scmp.ne.s32.totalorder %s30, %s46
      %p48 = scmp.eq.s32.totalorder %s22, 0
      %p49 = por %p47, %p48
      %s51 = sadd.s32 %s50, 1
      %p54 = scmp.eq.s32.totalorder %s16, 1
      %p55 = scmp.ne.s32.totalorder %s50, %s52
      %p56 = scmp.eq.s32.totalorder %s16, 0
      %p57 = por %p55, %p56
      %p58 = scmp.ne.s32.totalorder %s50, %s52
      %p59 = scmp.eq.s32.totalorder %s21, 1
      %p60 = por %p58, %p59
      %p61 = scmp.ne.s32.totalorder %s52, %s53
      %p62 = scmp.eq.s32.totalorder %s21, 0
      %p63 = por %p61, %p62
      %p64 = scmp.ne.s32.totalorder %s52, %s53
      %p65 = scmp.eq.s32.totalorder %s22, 1
      %p66 = por %p64, %p65
      %p68 = scmp.ne.s32.totalorder %s53, %s67
      %p69 = scmp.eq.s32.totalorder %s22, 0
      %p70 = por %p68, %p69
      %s72 = sadd.s32 %s71, 1
      %p75 = scmp.eq.s32.totalorder %s16, 1
      %p76 = scmp.ne.s32.totalorder %s71, %s73
      %p77 = scmp.eq.s32.totalorder %s16, 0
      %p78 = por %p76, %p77
      %p79 = scmp.ne.s32.totalorder %s71, %s73
      %p80 = scmp.eq.s32.totalorder %s21, 1
      %p81 = por %p79, %p80
      %p82 = scmp.ne.s32.totalorder %s73, %s74
      %p83 = scmp.eq.s32.totalorder %s21, 0
      %p84 = por %p82, %p83
      %p85 = scmp.ne.s32.totalorder %s73, %s74
      %p86 = scmp.eq.s32.totalorder %s22, 1
      %p87 = por %p85, %p86
      %p89 = scmp.ne.s32.totalorder %s74, %s88
      %p90 = scmp.eq.s32.totalorder %s22, 0
      %p91 = por %p89, %p90
      %s92 = ssub.s32 %s16, %s23
      %p93 = scmp.eq.s32.totalorder %s92, 0
      %s95 = sadd.s32 %s94, 1
      %s96 = scalar_select %p93, %s94, %s95
      %p99 = pneg %p93
      %p100 = scmp.eq.s32.totalorder %s16, 1
      %p101 = por %p99, %p100
      %p102 = scmp.ne.s32.totalorder %s94, %s97
      %p103 = scmp.eq.s32.totalorder %s16, 0
      %p104 = por %p102, %p103
      %p105 = scmp.ne.s32.totalorder %s94, %s97
      %p106 = scmp.eq.s32.totalorder %s21, 1
      %p107 = por %p105, %p106
      %p108 = scmp.ne.s32.totalorder %s97, %s98
      %p109 = scmp.eq.s32.totalorder %s21, 0
      %p110 = por %p108, %p109
      %p111 = scmp.ne.s32.totalorder %s97, %s98
      %p112 = scmp.eq.s32.totalorder %s22, 1
      %p113 = por %p111, %p112
      %p115 = scmp.ne.s32.totalorder %s98, %s114
      %p116 = scmp.eq.s32.totalorder %s22, 0
      %p117 = por %p115, %p116
      %p118 = scmp.le.s32.totalorder 1, %s16
      %p119 = scmp.lt.s32.totalorder %s16, 3
      %p120 = pnand %p118, %p119
      %p121 = pneg %p120
      // Predicated region
      $region9: #{tpu_custom_call.1} parent=5 // pred_check
        _
      $region10: #{tpu_custom_call.1} parent=5 // pred_check_branch
        %123 = sbr.rel (%p120) target = $region12
      $region11: #{tpu_custom_call.1} parent=5 // pred_region
        %s124 = ssub.s32 %s16, 1
        // Predicated region
        $region13: #{tpu_custom_call.1} parent=11 // pred_check
          %p125 = pneg %p63
        $region14: #{tpu_custom_call.1} parent=11 // pred_check_branch
          %127 = sbr.rel (%p125) target = $region16
        $region15: #{tpu_custom_call.1} parent=11 // pred_region
          %s129 = ssub.s32 256, 256
          %130 = vsyncadd [#allocation6], %s129
          %s131 = sshll.u32 [#allocation5], 4
          %s132 = int_to_ptr.vmem [resolvable:$true] %s131
          %137 = dma.hbm_to_vmem [thread:$0]  %s1, 256, %s132, [#allocation6], 64, 64, 4
        $region16: #{tpu_custom_call.1} parent=11 // pred_fallthru
          _
        // Predicated region
        $region17: #{tpu_custom_call.1} parent=11 // pred_check
          %p138 = pneg %p84
        $region18: #{tpu_custom_call.1} parent=11 // pred_check_branch
          %140 = sbr.rel (%p138) target = $region20
        $region19: #{tpu_custom_call.1} parent=11 // pred_region
          %s142 = ssub.s32 128, 128
          %143 = vsyncadd [#allocation6], %s142
          %s145 = sshll.u32 [#allocation7], 4
          %s146 = int_to_ptr.vmem [resolvable:$true] %s145
          %148 = dma.hbm_to_vmem [thread:$0]  %s2, 128, %s146, [#allocation6]
        $region20: #{tpu_custom_call.1} parent=11 // pred_fallthru
          _
      $region12: #{tpu_custom_call.1} parent=5 // pred_fallthru
        _
      %p149 = scmp.lt.s32.totalorder %s16, 2
      // Predicated region
      $region21: #{tpu_custom_call.1} parent=5 // pred_check
        %p150 = pneg %p149
      $region22: #{tpu_custom_call.1} parent=5 // pred_check_branch
        %152 = sbr.rel (%p150) target = $region24
      $region23: #{tpu_custom_call.1} parent=5 // pred_region
        // Predicated region
        $region25: #{tpu_custom_call.1} parent=23 // pred_check
          %p153 = pneg %p36
        $region26: #{tpu_custom_call.1} parent=23 // pred_check_branch
          %155 = sbr.rel (%p153) target = $region28
        $region27: #{tpu_custom_call.1} parent=23 // pred_region
          %s156 = sand.u32 %s26, 1
          %s157 = scalar_lea.sflag [#allocation3], %s156
          %s158 = sand.u32 %s26, 1
          %s159 = smul.addr %s158, 8
          %s160 = scalar_lea.vmem [#allocation2], %s159
          %s162 = ssub.s32 128, 128
          %163 = vsyncadd %s157, %s162
          %s164 = smul.addr %s16, 128
          %s165 = scalar_lea.hbm %s0, %s164
          %s167 = sshll.u32 %s160, 4
          %s168 = int_to_ptr.vmem [resolvable:$true] %s167
          %170 = dma.hbm_to_vmem [thread:$0]  %s165, 128, %s168, %s157
        $region28: #{tpu_custom_call.1} parent=23 // pred_fallthru
          _
      $region24: #{tpu_custom_call.1} parent=5 // pred_fallthru
        _
      %p171 = scmp.le.s32.totalorder 1, %s16
      %p172 = scmp.lt.s32.totalorder %s16, 3
      %p173 = pnand %p171, %p172
      %p174 = pneg %p173
      // Predicated region
      $region29: #{tpu_custom_call.1} parent=5 // pred_check
        _
      $region30: #{tpu_custom_call.1} parent=5 // pred_check_branch
        %176 = sbr.rel (%p173) target = $region32
      $region31: #{tpu_custom_call.1} parent=5 // pred_region
        %s177 = ssub.s32 %s16, 1
        %s178 = sand.u32 %s29, 1
        %s179 = scalar_lea.sflag [#allocation3], %s178
        %s180 = sand.u32 %s29, 1
        %s181 = smul.addr %s180, 8
        %s182 = scalar_lea.vmem [#allocation2], %s181
        // Predicated region
        $region33: #{tpu_custom_call.1} parent=31 // pred_check
          %p183 = pneg %p42
        $region34: #{tpu_custom_call.1} parent=31 // pred_check_branch
          %185 = sbr.rel (%p183) target = $region36
        $region35: #{tpu_custom_call.1} parent=31 // pred_region
          %186 = dma.done %s179, 128
        $region36: #{tpu_custom_call.1} parent=31 // pred_fallthru
          _
        // Predicated region
        $region37: #{tpu_custom_call.1} parent=31 // pred_check
          %p187 = pneg %p63
        $region38: #{tpu_custom_call.1} parent=31 // pred_check_branch
          %189 = sbr.rel (%p187) target = $region40
        $region39: #{tpu_custom_call.1} parent=31 // pred_region
          %190 = dma.done [#allocation6], 256
        $region40: #{tpu_custom_call.1} parent=31 // pred_fallthru
          _
        // Predicated region
        $region41: #{tpu_custom_call.1} parent=31 // pred_check
          %p191 = pneg %p84
        $region42: #{tpu_custom_call.1} parent=31 // pred_check_branch
          %193 = sbr.rel (%p191) target = $region44
        $region43: #{tpu_custom_call.1} parent=31 // pred_region
          %194 = dma.done [#allocation6], 128
        $region44: #{tpu_custom_call.1} parent=31 // pred_fallthru
          _
        %s195 = sand.u32 %s29, 1
        %s196 = scalar_lea.sflag [#allocation3], %s195
        %s197 = sand.u32 %s29, 1
        %s198 = smul.addr %s197, 8
        %s199 = scalar_lea.vmem [#allocation2], %s198
        %p200 = pneg %p42
        %p201 = pneg %p39
        %p202 = pneg %p63
        %p203 = pneg %p60
        %p204 = pneg %p84
        %p205 = pneg %p81
        %p206 = pneg %p110
        %p207 = pneg %p107
        %s208 = sand.u32 %s97, 1
        %s209 = scalar_lea.sflag [#allocation4], %s208
        %s210 = sand.u32 %s97, 1
        %s211 = smul.addr %s210, 8
        %s212 = scalar_lea.vmem [#allocation8], %s211
        %v214 = vld [vmem:[%s182] sm:$0xff]
        %v215 = vpack.c.bf16 %v214, %v214
        %v216 = vld [vmem:[#allocation5] sm:$0xf]
        %v217 = vld [vmem:[#allocation5 + $0x4] sm:$0xf]
        %v218 = vld [vmem:[#allocation5 + $0x8] sm:$0xf]
        %v219 = vld [vmem:[#allocation5 + $0xc] sm:$0xf]
        %v220 = vld [vmem:[#allocation7] sm:$0x1]
        %v221 = vlaneseq
        %v222 = vshrl.u32 %v221, 7
        %v223 = vsub.s32 0, %v222
        %v224 = vrot.slane %v220, %v223
        %v229 = vunpack.c.l.b16 %v216
        %v230 = vunpack.c.l.b16 %v217
        %v231 = vunpack.c.l.b16 %v218
        %v232 = vunpack.c.l.b16 %v219
        %v233 = vpack.c.b16 %v230, %v229
        %v234 = vpack.c.b16 %v232, %v231
        %vm237 = vcmask 261120
        %v239 = vsel %vm237, %v215, 0
        %241 = vmatprep.subr.bf16.mxu0 0
        %242 = vmatpush1.bf16.msra.mxu0 0
        %243 = vmatprep.subr.bf16.mxu0 0
        %244 = vmatpush1.bf16.msra.mxu0 0
        %245 = vmatprep.subr.bf16.mxu0 0
        %246 = vmatpush1.bf16.msra.mxu0 0
        %247 = vmatprep.subr.bf16.mxu0 0
        %248 = vmatpush1.bf16.msra.mxu0 0
        %249 = vmatprep.subr.bf16.mxu0 0
        %250 = vmatpush1.bf16.msra.mxu0 0
        %251 = vmatprep.subr.bf16.mxu0 0
        %252 = vmatpush1.bf16.msra.mxu0 0
        %253 = vmatprep.subr.bf16.mxu0 0
        %254 = vmatpush1.bf16.msra.mxu0 %v234
        %255 = vmatprep.subr.bf16.mxu0 0
        %256 = vmatpush1.bf16.msra.mxu0 %v233
        %257 = vmatprep.subr.bf16.mxu0 0
        %258 = vmatpush2.bf16.msra.mxu0 0
        %259 = vmatprep.subr.bf16.mxu0 0
        %260 = vmatpush2.bf16.msra.mxu0 0
        %261 = vmatprep.subr.bf16.mxu0 0
        %262 = vmatpush2.bf16.msra.mxu0 0
        %263 = vmatprep.subr.bf16.mxu0 0
        %264 = vmatpush2.bf16.msra.mxu0 0
        %265 = vmatprep.subr.bf16.mxu0 0
        %266 = vmatpush2.bf16.msra.mxu0 0
        %267 = vmatprep.subr.bf16.mxu0 0
        %268 = vmatpush2.bf16.msra.mxu0 0
        %269 = vmatprep.subr.bf16.mxu0 0
        %270 = vmatpush2.bf16.msra.mxu0 0
        %271 = vmatprep.subr.bf16.mxu0 0
        %272 = vmatpush2.bf16.msra.mxu0 0
        %273 = vmatprep.mubr.bf16.mxu0 0
        %274 = vmatmul.mubr.bf16.gmra.mxu0 %v239
        %v275 = vpop.f32.mrf.mxu0
        %v276 = vadd.f32 %v224, %v275
        %v277 = vpop.f32.mrf.mxu0
        %v278 = vpop.f32.mrf.mxu0
        %v279 = vpop.f32.mrf.mxu0
        %280 = vdwg.mxu0
        %281 = vadd.xlane.f32.xlu0 %v276
        %v282 = vpop.xlane.xlu0 %281
        %v283 = vmul.f32 %v282, 0.0078125
        %v284 = vsub.f32 %v276, %v283
        %v285 = vmul.f32 %v284, %v284
        %286 = vadd.xlane.f32.xlu0 %v285
        %v287 = vpop.xlane.xlu0 %286
        %v288 = vmul.f32 %v287, 0.0078125
        %v289 = vadd.f32 %v288, 1e-12
        %v290 = vrsqrt.pop %v289
        %v291 = vld [vmem:[#allocation7 + $0x1] sm:$0x1]
        %v292 = vld [vmem:[#allocation7 + $0x2] sm:$0x1]
        %v293 = vld [vmem:[#allocation7 + $0x3] sm:$0x1]
        %v294 = vld [vmem:[#allocation7 + $0x4] sm:$0x1]
        %296 = vrot.lane.b32.xlu0 %v214, 32
        %v297 = vpop.permute.xlu0 %296
        %299 = vrot.lane.b32.xlu0 %v214, 64
        %v300 = vpop.permute.xlu0 %299
        %302 = vrot.lane.b32.xlu0 %v214, 96
        %v303 = vpop.permute.xlu0 %302
        %v305 = vsel %vm237, %v214, %v297
        %vm306 = vcmask 523264
        %v307 = vsel %vm306, %v305, %v300
        %vm308 = vcmask 785408
        %v309 = vsel %vm308, %v307, %v303
        %v310 = vmul.f32 %v284, %v290
        %v311 = vlaneseq
        %v312 = vshrl.u32 %v311, 7
        %v313 = vsub.s32 0, %v312
        %v314 = vrot.slane %v291, %v313
        %v315 = vmul.f32 %v310, %v314
        %v316 = vlaneseq
        %v317 = vshrl.u32 %v316, 7
        %v318 = vsub.s32 0, %v317
        %v319 = vrot.slane %v292, %v318
        %v320 = vadd.f32 %v315, %v319
        %v321 = vadd.f32 %v320, %v309
        %vm322 = vcmp.gt.f32.partialorder %v321, 0.0
        %v323 = vlaneseq
        %v324 = vshrl.u32 %v323, 7
        %v325 = vsub.s32 0, %v324
        %v326 = vrot.slane %v293, %v325
        %v327 = vmul.f32 %v326, %v321
        %v328 = vsel %vm322, %v321, %v327
        %v329 = vlaneseq
        %v330 = vshrl.u32 %v329, 7
        %v331 = vsub.s32 0, %v330
        %v332 = vrot.slane %v294, %v331
        %v333 = vadd.f32 %v328, %v332
        %334 = vst [vmem:[%s212] sm:$0xff] %v333
        %s335 = sand.u32 %s97, 1
        %s336 = scalar_lea.sflag [#allocation4], %s335
        %s337 = sand.u32 %s97, 1
        %s338 = smul.addr %s337, 8
        %s339 = scalar_lea.vmem [#allocation8], %s338
        // Predicated region
        $region45: #{tpu_custom_call.1} parent=31 // pred_check
          %p340 = pneg %p107
        $region46: #{tpu_custom_call.1} parent=31 // pred_check_branch
          %342 = sbr.rel (%p340) target = $region48
        $region47: #{tpu_custom_call.1} parent=31 // pred_region
          %s344 = ssub.s32 128, 128
          %345 = vsyncadd %s336, %s344
          %s346 = smul.addr %s21, 128
          %s347 = scalar_lea.hbm %s3, %s346
          %s349 = sshll.u32 %s339, 4
          %s350 = int_to_ptr.vmem [resolvable:$true] %s349
          %352 = dma.vmem_to_hbm [thread:$0]  %s350, 128, %s347, %s336
        $region48: #{tpu_custom_call.1} parent=31 // pred_fallthru
          _
      $region32: #{tpu_custom_call.1} parent=5 // pred_fallthru
        _
      %p353 = scmp.le.s32.totalorder 2, %s16
      // Predicated region
      $region49: #{tpu_custom_call.1} parent=5 // pred_check
        %p354 = pneg %p353
      $region50: #{tpu_custom_call.1} parent=5 // pred_check_branch
        %356 = sbr.rel (%p354) target = $region52
      $region51: #{tpu_custom_call.1} parent=5 // pred_region
        %s357 = ssub.s32 %s16, 2
        // Predicated region
        $region53: #{tpu_custom_call.1} parent=51 // pred_check
          %p358 = pneg %p113
        $region54: #{tpu_custom_call.1} parent=51 // pred_check_branch
          %360 = sbr.rel (%p358) target = $region56
        $region55: #{tpu_custom_call.1} parent=51 // pred_region
          %s361 = sand.u32 %s98, 1
          %s362 = scalar_lea.sflag [#allocation4], %s361
          %s363 = sand.u32 %s98, 1
          %s364 = smul.addr %s363, 8
          %s365 = scalar_lea.vmem [#allocation8], %s364
          %366 = dma.done %s362, 128
        $region56: #{tpu_custom_call.1} parent=51 // pred_fallthru
          _
      $region52: #{tpu_custom_call.1} parent=5 // pred_fallthru
        _
    $region6: #{tpu_custom_call.1} parent=1 // loop_footer
      %s20 = sadd.s32 1, %s16
    $region7: #{tpu_custom_call.1} parent=1 // loop_footer_branch
      %15 = sbr.rel target = $region3
    $region8: #{tpu_custom_call.1} parent=1 // loop_exit
      _
    %367 = vsyncpa [#allocation3], 1
    %s368 = scalar_lea.sflag [#allocation3], 1
    %369 = vsyncpa %s368, 1
    %370 = vsyncpa [#allocation6], 1
    %371 = vsyncpa [#allocation4], 1
    %s372 = scalar_lea.sflag [#allocation4], 1
    %373 = vsyncpa %s372, 1

</llo_original>
